<compile_context>
chip_gen: v7x
topology: tpu7x:2x2x1
jax: 0.10.0
libtpu: 0.0.40
codegen_flags: <defaults>
</compile_context>

<pallas_src>
import functools

import jax
import jax.numpy as jnp
from jax.experimental import pallas as pl
from jax.experimental.pallas import tpu as pltpu


# ----------------------------------------------------------------------------
# Fused cell kernel (channels on sublane, batch*spatial on lane)
# ----------------------------------------------------------------------------
def _cell_kernel(x_ref, w_ref, b_ref, o_ref, *, channels, num_nodes):
    """One grid step = one lane tile of the whole cell.

    x_ref : (2*Cpp + Cprev, TILE_M)  stacked pre-ReLU activations
                                     [s0 @ offsets (0,0); s0 @ offsets (1,1); s1]
    w_ref : (2*C, 2*Cpp + Cprev)     block-diag [[Wfr, 0], [0, Wsc]], BN folded, bf16
    b_ref : (2*C, 1)                 folded BN biases [bfr; bsc], f32
    o_ref : (num_nodes*C, TILE_M)    channel-concat of node outputs
    """
    x = jnp.maximum(x_ref[...], 0.0)                    # ReLU on f32 (VPU fast path)
    w = w_ref[...]
    # Single fused MXU matmul for preproc0 + preproc1 (f32 accumulate).
    t = jnp.dot(w, x.astype(w.dtype), preferred_element_type=jnp.float32)
    t = t + b_ref[...]                                  # one combined bias add
    t0 = t[:channels, :]                                # preproc0 output
    t1 = t[channels:, :]                                # preproc1 output

    # TODO(synk): mmrazor's `Placeholder` / `Node` edges have no forward() in
    # the reference (they are replaced by searchable ops before any forward
    # runs).  Deterministic stand-in: each node sums all previous tensors
    # (identity edges + sum aggregation).  With a running sum this is O(n):
    # node_i == running sum before it is appended, so the next running sum is
    # simply node + node.
    node = t0 + t1                                      # node_2
    for i in range(num_nodes):
        o_ref[i * channels:(i + 1) * channels, :] = node
        if i + 1 < num_nodes:
            node = node + node                          # running-sum update


# ----------------------------------------------------------------------------
# Parameter helpers
# ----------------------------------------------------------------------------
def fold_bn(gamma, beta, running_mean, running_var, eps=1e-5):
    scale = gamma / jnp.sqrt(running_var + eps)
    bias = beta - running_mean * scale
    return scale.astype(jnp.float32), bias.astype(jnp.float32)


def init_cell_params(key, channels, prev_channels, prev_prev_channels):
    ks = jax.random.split(key, 7)
    half = channels // 2
    return {
        # FactorizedReduce (preproc0): two 1x1 stride-2 convs + BN(channels).
        # Conv weights use the PyTorch (Cout, Cin) orientation.
        "fr_w1": 0.1 * jax.random.normal(ks[0], (half, prev_prev_channels), jnp.float32),
        "fr_w2": 0.1 * jax.random.normal(ks[1], (half, prev_prev_channels), jnp.float32),
        "fr_gamma": 1.0 + 0.1 * jax.random.normal(ks[2], (channels,), jnp.float32),
        "fr_beta": 0.1 * jax.random.normal(ks[3], (channels,), jnp.float32),
        "fr_mean": jnp.zeros((channels,), jnp.float32),
        "fr_var": jnp.ones((channels,), jnp.float32),
        # StandardConv (preproc1): 1x1 stride-1 conv + BN(channels).
        "sc_w": 0.1 * jax.random.normal(ks[4], (channels, prev_channels), jnp.float32),
        "sc_gamma": 1.0 + 0.1 * jax.random.normal(ks[5], (channels,), jnp.float32),
        "sc_beta": 0.1 * jax.random.normal(ks[6], (channels,), jnp.float32),
        "sc_mean": jnp.zeros((channels,), jnp.float32),
        "sc_var": jnp.ones((channels,), jnp.float32),
    }


# ----------------------------------------------------------------------------
# Forward (single fused pallas_call)
# ----------------------------------------------------------------------------
@functools.partial(jax.jit, static_argnums=(3,))
def cell_forward(s0, s1, params, num_nodes):
    n, cpp, h0, w0 = s0.shape
    n1, cprev, h, w = s1.shape
    c = params["sc_w"].shape[0]
    half = c // 2
    assert n == n1
    assert c % 2 == 0, "FactorizedReduce requires an even channel count"
    # channels % 8 == 0 keeps sublane-slice stores aligned (perf, not correctness).
    # prev_reduction=True implies s0 has 2x the spatial size of s1, even dims.
    assert h0 == 2 * h and w0 == 2 * w and h0 % 2 == 0 and w0 % 2 == 0
    m = h * w
    nm = n * m
    cin_total = 2 * cpp + cprev

    # --- fold eval-mode BatchNorm into the conv weights (trace-time, tiny) ---
    fr_scale, fr_bias = fold_bn(params["fr_gamma"], params["fr_beta"],
                                params["fr_mean"], params["fr_var"])
    sc_scale, sc_bias = fold_bn(params["sc_gamma"], params["sc_beta"],
                                params["sc_mean"], params["sc_var"])
    zero = jnp.zeros((half, cpp), jnp.float32)
    # FactorizedReduce as one block-diagonal matmul (== conv1 || conv2 concat).
    wfr = jnp.concatenate(
        [jnp.concatenate([params["fr_w1"], zero], axis=1),
         jnp.concatenate([zero, params["fr_w2"]], axis=1)], axis=0)   # (C, 2*Cpp)
    wfr = wfr * fr_scale[:, None]
    wsc = params["sc_w"] * sc_scale[:, None]                          # (C, Cprev)
    # Fuse BOTH preprocs into a single block-diagonal weight (2C, 2*Cpp+Cprev);
    # the zero blocks are absorbed by the MXU's padded contraction dim.
    wcomb = jnp.zeros((2 * c, cin_total), jnp.float32)
    wcomb = wcomb.at[:c, :2 * cpp].set(wfr)
    wcomb = wcomb.at[c:, 2 * cpp:].set(wsc)
    wcomb = wcomb.astype(jnp.bfloat16)              # bf16 MXU operands, f32 accum
    bcomb = jnp.concatenate([fr_bias, sc_bias])[:, None]              # (2C, 1) f32

    # --- channels on sublane, batch*spatial on lane (no NCHW<->NHWC anywhere) --
    # FactorizedReduce sampling: conv1 sees offsets (0,0); conv2 sees
    # x[:, :, 1:, 1:] stride 2 -> offsets (1,1).
    # TODO(synk): at real DARTS sizes keep s0 in HBM (memory_space=pl.ANY) and
    # do this stride-2 gather with strided reads / manual DMA inside the kernel
    # to avoid an extra HBM pass; negligible at this toy size.
    def to_cm(x):  # (N, C, H, W) -> (C, N*H*W): fold batch into the lane axis
        return jnp.transpose(x, (1, 0, 2, 3)).reshape(x.shape[1], -1)

    sub1 = s0[:, :, 0::2, 0::2]                                       # (N, Cpp, H, W)
    sub2 = s0[:, :, 1::2, 1::2]
    x = jnp.concatenate([to_cm(sub1), to_cm(sub2), to_cm(s1)], axis=0)  # (Cin, N*M)

    # Lane-axis grid: weights/bias stay VMEM-resident (constant index_map),
    # activation/output tiles stream.  At the toy size this is a single step.
    tile_m = nm if nm <= 2048 else 2048   # >=1024 lanes at real sizes, VMEM-safe on v7x
    grid = (pl.cdiv(nm, tile_m),)

    out = pl.pallas_call(
        functools.partial(_cell_kernel, channels=c, num_nodes=num_nodes),
        out_shape=jax.ShapeDtypeStruct((num_nodes * c, nm), jnp.float32),
        grid=grid,
        in_specs=[
            pl.BlockSpec((cin_total, tile_m), lambda i: (0, i)),
            pl.BlockSpec((2 * c, cin_total), lambda i: (0, 0)),
            pl.BlockSpec((2 * c, 1), lambda i: (0, 0)),
        ],
        out_specs=pl.BlockSpec((num_nodes * c, tile_m), lambda i: (0, i)),
        compiler_params=pltpu.CompilerParams(
            dimension_semantics=("parallel",),          # v7x megacore; no-op on v5e/v6e
            vmem_limit_bytes=32 * 1024 * 1024),
    )(x, wcomb, bcomb)

    # (num_nodes*C, N*M) -> (N, num_nodes*C, H, W)
    return jnp.transpose(out.reshape(num_nodes * c, n, h, w), (1, 0, 2, 3))


# ----------------------------------------------------------------------------
# Pure-JAX reference (NCHW, mirrors the PyTorch module + node stand-in)
# ----------------------------------------------------------------------------
def reference_cell(s0, s1, params, num_nodes, eps=1e-5):
    def conv1x1(x, wgt):                       # x NCHW, wgt (Cout, Cin)
        return jnp.einsum("oc,nchw->nohw", wgt, x)

    def bn(x, gamma, beta, mean, var):
        scale = gamma / jnp.sqrt(var + eps)
        bias = beta - mean * scale
        return x * scale[None, :, None, None] + bias[None, :, None, None]

    x0 = jnp.maximum(s0, 0.0)
    t0 = bn(jnp.concatenate([conv1x1(x0[:, :, 0::2, 0::2], params["fr_w1"]),
                             conv1x1(x0[:, :, 1::2, 1::2], params["fr_w2"])], axis=1),
            params["fr_gamma"], params["fr_beta"], params["fr_mean"], params["fr_var"])
    t1 = bn(conv1x1(jnp.maximum(s1, 0.0), params["sc_w"]),
            params["sc_gamma"], params["sc_beta"], params["sc_mean"], params["sc_var"])
    tensors = [t0, t1]
    for _ in range(num_nodes):
        cur = tensors[0]
        for t in tensors[1:]:
            cur = cur + t
        tensors.append(cur)
    return jnp.concatenate(tensors[2:], axis=1)


# ----------------------------------------------------------------------------
if __name__ == "__main__":
    # Cell(num_nodes=2, channels=8, prev_channels=8, prev_prev_channels=8,
    #      reduction=False, prev_reduction=True)
    num_nodes = 2
    channels = 8
    prev_channels = 8
    prev_prev_channels = 8

    key = jax.random.PRNGKey(0)
    k_s0, k_s1, k_p = jax.random.split(key, 3)

    # prev_reduction=True -> s0 has 2x the spatial size of s1.
    s0 = jax.random.normal(k_s0, (2, prev_prev_channels, 16, 16), jnp.float32)
    s1 = jax.random.normal(k_s1, (2, prev_channels, 8, 8), jnp.float32)
    params = init_cell_params(k_p, channels, prev_channels, prev_prev_channels)

    out = jax.block_until_ready(cell_forward(s0, s1, params, num_nodes))

    expected_shape = (2, num_nodes * channels, 8, 8)
    assert out.shape == expected_shape, (out.shape, expected_shape)
    assert bool(jnp.all(jnp.isfinite(out)))

    ref = jax.block_until_ready(reference_cell(s0, s1, params, num_nodes))
    max_err = float(jnp.max(jnp.abs(out - ref)))
    # bf16 MXU operands (reference einsum also runs bf16 MXU passes by default)
    assert max_err < 2e-2, f"max abs error vs reference: {max_err}"

    print("KERNEL_OK")
</pallas_src>

<mosaic_0001>
module attributes {stable_mosaic.version = 11 : i64} {
  func.func @_cell_kernel(%arg0: i32, %arg1: memref<24x128xf32, #tpu.memory_space<vmem>>, %arg2: memref<16x24xbf16, #tpu.memory_space<vmem>>, %arg3: memref<16x1xf32, #tpu.memory_space<vmem>>, %arg4: memref<16x128xf32, #tpu.memory_space<vmem>>) attributes {dimension_semantics = [#tpu.dimension_semantics<parallel>], iteration_bounds = array<i64: 1>, scalar_prefetch = 0 : i64, scratch_operands = 0 : i64, tpu.core_type = #tpu.core_type<tc>, window_params = [{transform_indices = @transform_0, window_bounds = array<i64: 24, 128>}, {pipeline_mode = #tpu.pipeline_mode<synchronous>, transform_indices = @transform_1, window_bounds = array<i64: 16, 24>}, {pipeline_mode = #tpu.pipeline_mode<synchronous>, transform_indices = @transform_2, window_bounds = array<i64: 16, 1>}, {transform_indices = @transform_3, window_bounds = array<i64: 16, 128>}]} {
    %c0 = arith.constant 0 : index
    %c0_0 = arith.constant 0 : index
    %0 = vector.load %arg1[%c0, %c0_0] : memref<24x128xf32, #tpu.memory_space<vmem>>, vector<24x128xf32>
    %cst = arith.constant 0.000000e+00 : f32
    %1 = vector.broadcast %cst : f32 to vector<24x128xf32>
    %2 = arith.maximumf %0, %1 : vector<24x128xf32>
    %c0_1 = arith.constant 0 : index
    %c0_2 = arith.constant 0 : index
    %3 = vector.load %arg2[%c0_1, %c0_2] : memref<16x24xbf16, #tpu.memory_space<vmem>>, vector<16x24xbf16>
    %4 = arith.truncf %2 : vector<24x128xf32> to vector<24x128xbf16>
    %cst_3 = arith.constant dense<0.000000e+00> : vector<16x128xf32>
    %5 = tpu.matmul %3, %4, %cst_3 {dimension_numbers = #tpu.dot_dimension_numbers<[1], [0], [0], [1], [0, 0, 1, 1], [], []>} : vector<16x24xbf16>, vector<24x128xbf16>, vector<16x128xf32> -> vector<16x128xf32>
    %c0_4 = arith.constant 0 : index
    %c0_5 = arith.constant 0 : index
    %6 = vector.load %arg3[%c0_4, %c0_5] : memref<16x1xf32, #tpu.memory_space<vmem>>, vector<16x1xf32>
    %7 = vector.broadcast %6 : vector<16x1xf32> to vector<16x128xf32>
    %8 = arith.addf %5, %7 : vector<16x128xf32>
    %9 = vector.extract_strided_slice %8 {offsets = [0, 0], sizes = [8, 128], strides = [1, 1]} : vector<16x128xf32> to vector<8x128xf32>
    %10 = vector.extract_strided_slice %8 {offsets = [8, 0], sizes = [8, 128], strides = [1, 1]} : vector<16x128xf32> to vector<8x128xf32>
    %11 = arith.addf %9, %10 : vector<8x128xf32>
    %c0_6 = arith.constant 0 : index
    %c0_7 = arith.constant 0 : index
    %12 = vector.load %arg4[%c0_6, %c0_7] : memref<16x128xf32, #tpu.memory_space<vmem>>, vector<8x128xf32>
    tpu.vector_store %arg4[%c0_6, %c0_7], %11 {strides = array<i32>} : memref<16x128xf32, #tpu.memory_space<vmem>>, vector<8x128xf32>,
    %13 = arith.addf %11, %11 : vector<8x128xf32>
    %c8 = arith.constant 8 : index
    %c0_8 = arith.constant 0 : index
    %14 = vector.load %arg4[%c8, %c0_8] : memref<16x128xf32, #tpu.memory_space<vmem>>, vector<8x128xf32>
    tpu.vector_store %arg4[%c8, %c0_8], %13 {strides = array<i32>} : memref<16x128xf32, #tpu.memory_space<vmem>>, vector<8x128xf32>,
    return
  }
  func.func @transform_0(%arg0: i32) -> (i32, i32) {
    %c0_i32 = arith.constant 0 : i32
    %c0_i32_0 = arith.constant 0 : i32
    return %c0_i32, %arg0 : i32, i32
  }
  func.func @transform_1(%arg0: i32) -> (i32, i32) {
    %c0_i32 = arith.constant 0 : i32
    %c0_i32_0 = arith.constant 0 : i32
    %c0_i32_1 = arith.constant 0 : i32
    return %c0_i32, %c0_i32_0 : i32, i32
  }
  func.func @transform_2(%arg0: i32) -> (i32, i32) {
    %c0_i32 = arith.constant 0 : i32
    %c0_i32_0 = arith.constant 0 : i32
    %c0_i32_1 = arith.constant 0 : i32
    return %c0_i32, %c0_i32_0 : i32, i32
  }
  func.func @transform_3(%arg0: i32) -> (i32, i32) {
    %c0_i32 = arith.constant 0 : i32
    %c0_i32_0 = arith.constant 0 : i32
    return %c0_i32, %arg0 : i32, i32
  }
}

</mosaic_0001>

<llo_original>
// kernel: cell_forward.1
$region0: #{cell_forward.1}
  #allocation0 [shape = 'u32[]', space=smem, size = 0x4, offset = 0x4, fixed_abs, tag = 'smem constant byte address 0x4 - core index']
  #allocation1 [shape = 'u32[144,128]{1,0:T(1,128)}', space=vmem, size = 0x12000, scoped, tag = 'internal scratch']
  %s0 = inlined_call_operand.vmem [shape: f32[24,128], index: 0, kind: input, shape index: {}]
  %s1 = inlined_call_operand.vmem [shape: bf16[16,24], index: 1, kind: input, shape index: {}]
  %s2 = inlined_call_operand.vmem [shape: f32[16,1], index: 2, kind: input, shape index: {}]
  %s3 = inlined_call_operand.vmem [shape: f32[16,128], index: 3, kind: output, shape index: {}]
  %s4 = sld [smem:[#allocation0]]
  $region22: #{cell_forward.1} parent=0
    _
  %s6 = ssub.s32 1, %s4
  %s7 = scalar_select 0, %s6, %s4
  // Predicated region
  $region2: #{cell_forward.1} parent=0 // pred_check
    _
  $region3: #{cell_forward.1} parent=0 // pred_check_branch
    %9 = sbr.rel (0) target = $region5
  $region4: #{cell_forward.1} parent=0 // pred_region
    _
  $region5: #{cell_forward.1} parent=0 // pred_fallthru
    _
  // Predicated region
  $region6: #{cell_forward.1} parent=0 // pred_check
    _
  $region7: #{cell_forward.1} parent=0 // pred_check_branch
    %11 = sbr.rel (0) target = $region9
  $region8: #{cell_forward.1} parent=0 // pred_region
    _
  $region9: #{cell_forward.1} parent=0 // pred_fallthru
    _
  // Predicated region
  $region10: #{cell_forward.1} parent=0 // pred_check
    _
  $region11: #{cell_forward.1} parent=0 // pred_check_branch
    %13 = sbr.rel (0) target = $region13
  $region12: #{cell_forward.1} parent=0 // pred_region
    _
  $region13: #{cell_forward.1} parent=0 // pred_fallthru
    _
  %v15 = vld [vmem:[%s0] sm:$0xff]
  %v16 = vld [vmem:[%s0 + $0x8] sm:$0xff]
  %v17 = vld [vmem:[%s0 + $0x10] sm:$0xff]
  %v18 = vmax.f32 %v15, 0.0
  %v19 = vmax.f32 %v16, 0.0
  %v20 = vmax.f32 %v17, 0.0
  %v21 = vld [vmem:[%s1] sm:$0xf]
  %v22 = vld [vmem:[%s1 + $0x4] sm:$0xf]
  %v23 = vpack.c.bf16 %v19, %v18
  %v24 = vpack.c.bf16 %v20, %v20
  %v25 = vld [vmem:[%s2] sm:$0xff]
  %v26 = vld [vmem:[%s2 + $0x8] sm:$0xff]
  %28 = vset.pattern.permute.xlu0 0
  %29 = vperm.xlu0 %28, %v25
  %v30 = vpop.permute.xlu0 %29
  %33 = vset.pattern.permute.xlu0 0
  %34 = vperm.xlu0 %33, %v26
  %v35 = vpop.permute.xlu0 %34
  %v39 = vunpack.c.l.b16 %v21
  %v40 = vunpack.c.l.b16 %v22
  %v41 = vpack.c.b16 %v40, %v39
  %vm42 = vcmask 195584
  %v44 = vsel %vm42, %v41, 0
  %vm46 = vcmask 1043456
  %v48 = vsel %vm46, %v24, 0
  %50 = vmatprep.subr.bf16.mxu0 0
  %51 = vmatpush1.bf16.msra.mxu0 %v23
  %52 = vmatprep.subr.bf16.mxu0 0
  %53 = vmatpush1.bf16.msra.mxu0 %v48
  %54 = vmatprep.subr.bf16.mxu0 0
  %55 = vmatpush1.bf16.msra.mxu0 0
  %56 = vmatprep.subr.bf16.mxu0 0
  %57 = vmatpush1.bf16.msra.mxu0 0
  %58 = vmatprep.subr.bf16.mxu0 0
  %59 = vmatpush1.bf16.msra.mxu0 0
  %60 = vmatprep.subr.bf16.mxu0 0
  %61 = vmatpush1.bf16.msra.mxu0 0
  %62 = vmatprep.subr.bf16.mxu0 0
  %63 = vmatpush1.bf16.msra.mxu0 0
  %64 = vmatprep.subr.bf16.mxu0 0
  %65 = vmatpush1.bf16.msra.mxu0 0
  %66 = vmatprep.subr.bf16.mxu0 0
  %67 = vmatpush1.bf16.msra.mxu0 0
  %68 = vmatprep.subr.bf16.mxu0 0
  %69 = vmatpush1.bf16.msra.mxu0 0
  %70 = vmatprep.subr.bf16.mxu0 0
  %71 = vmatpush1.bf16.msra.mxu0 0
  %72 = vmatprep.subr.bf16.mxu0 0
  %73 = vmatpush1.bf16.msra.mxu0 0
  %74 = vmatprep.subr.bf16.mxu0 0
  %75 = vmatpush1.bf16.msra.mxu0 0
  %76 = vmatprep.subr.bf16.mxu0 0
  %77 = vmatpush1.bf16.msra.mxu0 0
  %78 = vmatprep.subr.bf16.mxu0 0
  %79 = vmatpush1.bf16.msra.mxu0 0
  %80 = vmatprep.subr.bf16.mxu0 0
  %81 = vmatpush1.bf16.msra.mxu0 0
  %82 = vmatprep.mubr.bf16.mxu0 0
  %83 = vmatmul.mubr.bf16.gmra.mrb[0].mxu0 %v44
  %v84 = vpop.f32.mrb[0].mxu0
  %v85 = vadd.f32 %v30, %v84
  %v86 = vpop.f32.mrb[0].mxu0
  %v87 = vpop.f32.mrb[0].mxu0
  %v88 = vadd.f32 %v35, %v87
  %v89 = vpop.f32.mrb[0].mxu0
  %90 = vdwg.mxu0
  %v91 = vadd.f32 %v85, %v88
  %92 = vst [vmem:[%s3] sm:$0xff] %v91
  %v93 = vadd.f32 %v91, %v91
  %94 = vst [vmem:[%s3 + $0x8] sm:$0xff] %v93
  // Predicated region
  $region14: #{cell_forward.1} parent=0 // pred_check
    _
  $region15: #{cell_forward.1} parent=0 // pred_check_branch
    %96 = sbr.rel (0) target = $region17
  $region16: #{cell_forward.1} parent=0 // pred_region
    _
  $region17: #{cell_forward.1} parent=0 // pred_fallthru
    _
  // Predicated region
  $region18: #{cell_forward.1} parent=0 // pred_check
    _
  $region19: #{cell_forward.1} parent=0 // pred_check_branch
    %98 = sbr.rel (0) target = $region21
  $region20: #{cell_forward.1} parent=0 // pred_region
    _
  $region21: #{cell_forward.1} parent=0 // pred_fallthru
    _

</llo_original>
